<compile_context>
chip_gen: v7x
topology: tpu7x:2x2x1
jax: 0.10.0
libtpu: 0.0.40
codegen_flags: <defaults>
</compile_context>

<pallas_src>
import functools

import numpy as np
import jax
import jax.numpy as jnp
from jax import lax
from jax.experimental import pallas as pl
from jax.experimental.pallas import tpu as pltpu


# ---------------------------------------------------------------------------
# Kernel A: spatial-softmax pooling (class_feat) + query projection, hw-tiled.
# ---------------------------------------------------------------------------
def _pool_query_kernel(cmax_ref, x_ref, co_ref, wq_ref, bq_ref,
                       cf_ref, q_ref, acc_ref, s_ref):
    # cmax_ref: (1, ncls, 1)    per-class stability offset (upper bound of coarse logits)
    # x_ref   : (1, c, thw)     feature tile, lane-dense over hw (compute dtype)
    # co_ref  : (1, ncls, thw)  upsampled coarse logits, CLASS-major / lane-dense (f32)
    # wq_ref  : (kd, c) compute dtype;   bq_ref: (kd, 1) f32
    # cf_ref  : (1, c, ncls)    normalized class_feat output (f32), written at the last hw tile
    # q_ref   : (1, kd, thw)    query-projection tile output (compute dtype)
    # acc_ref : (c, ncls) f32   scratch — unnormalized class_feat accumulator
    # s_ref   : (1, ncls) f32   scratch — per-class softmax partition sums
    t = pl.program_id(1)

    @pl.when(t == 0)
    def _():
        acc_ref[...] = jnp.zeros_like(acc_ref)
        s_ref[...] = jnp.zeros_like(s_ref)

    x = x_ref[0]                                         # (c, thw)
    # Spatial softmax numerator: lane-dense exp over the full 128-lane width.
    ce = jnp.exp(co_ref[0] - cmax_ref[0])                # (ncls, thw) f32, values in (0, 1]
    ce_m = ce.astype(x.dtype)

    # Unnormalized class_feat:  x (c, thw) contracted with ce (ncls, thw) over hw.  [MXU]
    acc_ref[...] += lax.dot_general(
        x, ce_m, (((1,), (1,)), ((), ())), preferred_element_type=jnp.float32)
    # Per-class partition sums, produced directly lane-major as (1, ncls).       [MXU, tiny]
    ones_row = jnp.ones((1, ce_m.shape[-1]), ce_m.dtype)
    s_ref[...] += lax.dot_general(
        ones_row, ce_m, (((1,), (1,)), ((), ())), preferred_element_type=jnp.float32)

    # Query projection for this hw tile (reuses the x tile already resident in VMEM).
    q = jnp.dot(wq_ref[...], x, preferred_element_type=jnp.float32) + bq_ref[...]
    q_ref[0] = q.astype(q_ref.dtype)

    @pl.when(t == pl.num_programs(1) - 1)
    def _():
        # Deferred softmax normalization: scale the small (c, ncls) accumulator instead of the
        # (ncls, hw) map; the reciprocal runs on the EUP in its own VLIW slot.
        cf_ref[0] = (acc_ref[...] * pl.reciprocal(s_ref[...], approx=True)
                     ).astype(cf_ref.dtype)


# ---------------------------------------------------------------------------
# Kernel B: class attention + output projection, fully parallel over hw tiles.
# ---------------------------------------------------------------------------
def _attention_kernel(cf_ref, q_ref, wkv_ref, bkv_ref, o_ref, *, key_dim, compute_dtype):
    # cf_ref : (1, c, ncls)     class_feat (f32)
    # q_ref  : (1, kd, thw)     query tile (compute dtype)
    # wkv_ref: (kd+vd, c)       merged [Wk; Wv] (compute dtype);  bkv_ref: (kd+vd, 1) f32
    # o_ref  : (1, vd, thw)
    cf = cf_ref[0].astype(compute_dtype)                          # (c, ncls)
    kv = jnp.dot(wkv_ref[...], cf, preferred_element_type=jnp.float32) + bkv_ref[...]
    k = kv[:key_dim]                                              # (kd, ncls)
    v = kv[key_dim:]                                              # (vd, ncls)
    q = q_ref[0]                                                  # (kd, thw)

    # energy^T = k^T @ q : contract kd directly — no materialized transpose.
    et = lax.dot_general(k.astype(compute_dtype), q,
                         (((0,), (0,)), ((), ())),
                         preferred_element_type=jnp.float32)      # (ncls, thw)
    et = et - jnp.max(et, axis=0, keepdims=True)
    ee = jnp.exp(et)                                              # unnormalized attention^T
    denom = jnp.sum(ee, axis=0, keepdims=True)                    # (1, thw)

    # out = v @ attention^T ; normalization deferred to the (vd, thw) result.
    out = jnp.dot(v.astype(compute_dtype), ee.astype(compute_dtype),
                  preferred_element_type=jnp.float32)             # (vd, thw)
    o_ref[0] = (out * pl.reciprocal(denom, approx=True)).astype(o_ref.dtype)


# ---------------------------------------------------------------------------
# Wrapper-side helpers.
# ---------------------------------------------------------------------------
@functools.lru_cache(maxsize=None)
def _bilinear_weights(out_size: int, in_size: int) -> np.ndarray:
    """PyTorch F.interpolate(mode='bilinear', align_corners=True) weights as an (out, in) matrix."""
    m = np.zeros((out_size, in_size), dtype=np.float32)
    if in_size == 1 or out_size == 1:
        m[:, 0] = 1.0
        return m
    scale = (in_size - 1) / (out_size - 1)
    for i in range(out_size):
        src = i * scale
        i0 = min(int(np.floor(src)), in_size - 1)
        i1 = min(i0 + 1, in_size - 1)
        frac = src - i0
        m[i, i0] += 1.0 - frac
        m[i, i1] += frac
    return m


def _round_up(v: int, m: int) -> int:
    return -(-v // m) * m


def _padded_bytes(shape, dtype) -> int:
    """Rough VMEM footprint of a tile, padding the trailing (sublane, lane) dims to (8, 128)."""
    s = list(shape)
    s[-1] = _round_up(s[-1], 128)
    if len(s) >= 2:
        s[-2] = _round_up(s[-2], 8)
    n = 1
    for d in s:
        n *= d
    return n * jnp.dtype(dtype).itemsize


def _vmem_capacity_bytes() -> int:
    try:
        info = pltpu.get_tpu_info()
        cap = getattr(info, "vmem_capacity_bytes", None)
        if cap:
            return int(cap)
    except Exception:
        pass
    return 64 * 1024 * 1024  # conservative fallback: v7x per-TensorCore VMEM


def _vmem_limit(est_bytes: int) -> int:
    # Raise the scoped limit above the default when needed (v5e/v6e have 128 MiB physical),
    # but always leave ~15% headroom for compiler scratch/semaphores (matters on v7x's 64 MiB).
    cap = _vmem_capacity_bytes()
    return int(min(max(int(est_bytes * 1.5), 32 * 1024 * 1024), int(cap * 0.85)))


def _pick_block_hw(hw: int, cap: int = 2048) -> int:
    """Largest multiple-of-128 divisor of hw up to `cap`; full extent if hw % 128 != 0."""
    if hw % 128 != 0:
        return hw
    best = 128
    d = 256
    while d <= min(hw, cap):
        if hw % d == 0:
            best = d
        d += 128
    return best


# ---------------------------------------------------------------------------
# Public forward.
# ---------------------------------------------------------------------------
def clf_module_forward(x, coarse, wq, bq, wk, bk, wv, bv, *,
                       compute_dtype=jnp.bfloat16, block_hw=None):
    """x: (n, c, h, w); coarse: (n, ncls, hc, wc); 1x1-conv weights/biases of the module."""
    n, c, h, w = x.shape
    ncls, hc, wc = coarse.shape[1], coarse.shape[2], coarse.shape[3]
    kd = wq.shape[0]
    vd = wv.shape[0]
    hw = h * w
    assert vd == c, "value_dim must equal in_dim for the final out.view(n, c, h, w)"

    if block_hw is None:
        block_hw = _pick_block_hw(hw)
    assert hw % block_hw == 0 and (block_hw % 128 == 0 or block_hw == hw), (
        f"block_hw={block_hw} must divide hw={hw} and be a multiple of 128 (or equal hw)")
    num_hw_tiles = hw // block_hw

    f32 = jnp.float32
    out_dtype = x.dtype

    # Wrapper glue: bilinear (align_corners=True) upsample of the small coarse map, emitted
    # directly in the class-major, lane-dense (n, ncls, hw) layout the kernels consume.
    # TODO(synk): fuse this separable upsample into kernel A (pass tiny coarse + uh/uw and do the
    # two small matmuls on-MXU) to avoid materializing co in HBM on VMEM-tight chips (v7x).
    uh = jnp.asarray(_bilinear_weights(h, hc))
    uw = jnp.asarray(_bilinear_weights(w, wc))
    co = jnp.einsum("ha,nkab,wb->nkhw", uh, coarse.astype(f32), uw).reshape(n, ncls, hw)
    # Per-class stability offset for the spatial softmax: the bilinear output is a convex
    # combination of the original coarse values, so their per-class max is a valid upper bound
    # (any constant per-class offset cancels exactly in softmax). Computed on the tiny map only.
    cmax = jnp.max(coarse.astype(f32), axis=(2, 3)).reshape(n, ncls, 1)

    x_flat = x.reshape(n, c, hw).astype(compute_dtype)
    wq_c = wq.astype(compute_dtype)
    bq2 = bq.reshape(kd, 1).astype(f32)
    wkv_c = jnp.concatenate([wk, wv], axis=0).astype(compute_dtype)          # (kd+vd, c)
    bkv2 = jnp.concatenate([bk, bv], axis=0).reshape(kd + vd, 1).astype(f32)

    const2 = lambda b, t: (0, 0)

    # --- phase A: spatial-softmax pooling + query projection (hw reduction axis) ------------
    est_a = 2 * (_padded_bytes((ncls, 1), f32)
                 + _padded_bytes((c, block_hw), compute_dtype)
                 + _padded_bytes((ncls, block_hw), f32)
                 + _padded_bytes((kd, c), compute_dtype)
                 + _padded_bytes((kd, 1), f32)
                 + _padded_bytes((c, ncls), f32)
                 + _padded_bytes((kd, block_hw), compute_dtype))
    est_a += _padded_bytes((c, ncls), f32) + _padded_bytes((1, ncls), f32)   # scratch

    class_feat, q_proj = pl.pallas_call(
        _pool_query_kernel,
        out_shape=(jax.ShapeDtypeStruct((n, c, ncls), f32),
                   jax.ShapeDtypeStruct((n, kd, hw), compute_dtype)),
        grid=(n, num_hw_tiles),
        in_specs=[
            pl.BlockSpec((1, ncls, 1), lambda b, t: (b, 0, 0)),
            pl.BlockSpec((1, c, block_hw), lambda b, t: (b, 0, t)),
            pl.BlockSpec((1, ncls, block_hw), lambda b, t: (b, 0, t)),
            pl.BlockSpec((kd, c), const2),
            pl.BlockSpec((kd, 1), const2),
        ],
        out_specs=(
            pl.BlockSpec((1, c, ncls), lambda b, t: (b, 0, 0)),
            pl.BlockSpec((1, kd, block_hw), lambda b, t: (b, 0, t)),
        ),
        scratch_shapes=[pltpu.VMEM((c, ncls), f32), pltpu.VMEM((1, ncls), f32)],
        compiler_params=pltpu.CompilerParams(
            dimension_semantics=("parallel", "arbitrary"),
            vmem_limit_bytes=_vmem_limit(est_a)),
    )(cmax, x_flat, co, wq_c, bq2)

    # --- phase B: class attention + output projection (fully parallel over hw tiles) --------
    est_b = 2 * (_padded_bytes((c, ncls), f32)
                 + _padded_bytes((kd, block_hw), compute_dtype)
                 + _padded_bytes((kd + vd, c), compute_dtype)
                 + _padded_bytes((kd + vd, 1), f32)
                 + _padded_bytes((vd, block_hw), out_dtype))

    attn_kernel = functools.partial(_attention_kernel, key_dim=kd,
                                    compute_dtype=compute_dtype)
    out = pl.pallas_call(
        attn_kernel,
        out_shape=jax.ShapeDtypeStruct((n, vd, hw), out_dtype),
        grid=(n, num_hw_tiles),
        in_specs=[
            pl.BlockSpec((1, c, ncls), lambda b, t: (b, 0, 0)),
            pl.BlockSpec((1, kd, block_hw), lambda b, t: (b, 0, t)),
            pl.BlockSpec((kd + vd, c), const2),
            pl.BlockSpec((kd + vd, 1), const2),
        ],
        out_specs=pl.BlockSpec((1, vd, block_hw), lambda b, t: (b, 0, t)),
        compiler_params=pltpu.CompilerParams(
            dimension_semantics=("parallel", "parallel"),
            vmem_limit_bytes=_vmem_limit(est_b)),
    )(class_feat, q_proj, wkv_c, bkv2)

    return out.reshape(n, vd, h, w)


# ---------------------------------------------------------------------------
# Pure-JAX reference of the (fixed) PyTorch forward, for correctness checking.
# ---------------------------------------------------------------------------
def _reference(x, coarse, wq, bq, wk, bk, wv, bv):
    n, c, h, w = x.shape
    ncls, hc, wc = coarse.shape[1], coarse.shape[2], coarse.shape[3]
    hw = h * w
    hi = jax.lax.Precision.HIGHEST
    uh = jnp.asarray(_bilinear_weights(h, hc))
    uw = jnp.asarray(_bilinear_weights(w, wc))
    coarse_up = jnp.einsum("ha,nkab,wb->nkhw", uh, coarse, uw).reshape(n, ncls, hw)
    cn = jax.nn.softmax(coarse_up, axis=-1)                          # softmax over spatial dim
    xf = x.reshape(n, c, hw)
    cf = jnp.einsum("ncp,nkp->nck", xf, cn, precision=hi)            # class_feat (n, c, ncls)
    q = jnp.einsum("dc,ncp->ndp", wq, xf, precision=hi) + bq[None, :, None]
    k = jnp.einsum("dc,nck->ndk", wk, cf, precision=hi) + bk[None, :, None]
    v = jnp.einsum("dc,nck->ndk", wv, cf, precision=hi) + bv[None, :, None]
    energy = jnp.einsum("ndp,ndk->npk", q, k, precision=hi)          # (n, hw, ncls)
    attn = jax.nn.softmax(energy, axis=-1)                           # softmax over classes
    out = jnp.einsum("nvk,npk->nvp", v, attn, precision=hi)          # (n, vd, hw)
    return out.reshape(n, -1, h, w)


if __name__ == "__main__":
    key = jax.random.PRNGKey(0)
    n, c, h, w = 2, 8, 16, 16            # batch, in_dim, spatial  (hw = 256 -> 2 tiles of 128)
    ncls, hc, wc = 8, 8, 8               # coarse classes, coarse spatial (upsampled 8x8 -> 16x16)
    key_dim, value_dim = 8, c            # value_dim == in_dim (required by out.view)

    ks = jax.random.split(key, 8)
    x = jax.random.normal(ks[0], (n, c, h, w), dtype=jnp.float32)
    coarse = jax.random.normal(ks[1], (n, ncls, hc, wc), dtype=jnp.float32)
    wq = 0.2 * jax.random.normal(ks[2], (key_dim, c), dtype=jnp.float32)
    bq = 0.1 * jax.random.normal(ks[3], (key_dim,), dtype=jnp.float32)
    wk = 0.2 * jax.random.normal(ks[4], (key_dim, c), dtype=jnp.float32)
    bk = 0.1 * jax.random.normal(ks[5], (key_dim,), dtype=jnp.float32)
    wv = 0.2 * jax.random.normal(ks[6], (value_dim, c), dtype=jnp.float32)
    bv = 0.1 * jax.random.normal(ks[7], (value_dim,), dtype=jnp.float32)

    ref = _reference(x, coarse, wq, bq, wk, bk, wv, bv)

    # f32 MXU path (tight check); block_hw=128 exercises the multi-tile reduction/attention.
    out_f32 = jax.block_until_ready(
        clf_module_forward(x, coarse, wq, bq, wk, bk, wv, bv,
                           compute_dtype=jnp.float32, block_hw=128))
    assert out_f32.shape == (n, c, h, w), out_f32.shape
    err32 = float(jnp.max(jnp.abs(out_f32 - ref)))
    assert jnp.allclose(out_f32, ref, atol=5e-3, rtol=5e-3), \
        f"f32 path mismatch vs reference, max abs err={err32}"

    # bf16 MXU path (default): halves x/q HBM traffic, full-rate MXU; looser tolerance.
    out_bf16 = jax.block_until_ready(
        clf_module_forward(x, coarse, wq, bq, wk, bk, wv, bv, block_hw=128))
    errbf = float(jnp.max(jnp.abs(out_bf16 - ref)))
    assert jnp.allclose(out_bf16, ref, atol=2e-2, rtol=2e-2), \
        f"bf16 path mismatch vs reference, max abs err={errbf}"

    print("KERNEL_OK")
</pallas_src>

<mosaic_0001>
module attributes {stable_mosaic.version = 11 : i64} {
  func.func @_pool_query_kernel(%arg0: i32, %arg1: i32, %arg2: memref<1x8x1xf32, #tpu.memory_space<vmem>>, %arg3: memref<1x8x128xf32, #tpu.memory_space<vmem>>, %arg4: memref<1x8x128xf32, #tpu.memory_space<vmem>>, %arg5: memref<8x8xf32, #tpu.memory_space<vmem>>, %arg6: memref<8x1xf32, #tpu.memory_space<vmem>>, %arg7: memref<1x8x8xf32, #tpu.memory_space<vmem>>, %arg8: memref<1x8x128xf32, #tpu.memory_space<vmem>>, %arg9: memref<8x8xf32, #tpu.memory_space<vmem>>, %arg10: memref<1x8xf32, #tpu.memory_space<vmem>>) attributes {dimension_semantics = [#tpu.dimension_semantics<parallel>, #tpu.dimension_semantics<arbitrary>], iteration_bounds = array<i64: 2, 2>, scalar_prefetch = 0 : i64, scratch_operands = 2 : i64, tpu.core_type = #tpu.core_type<tc>, window_params = [{transform_indices = @transform_0, window_bounds = array<i64: 1, 8, 1>}, {transform_indices = @transform_1, window_bounds = array<i64: 1, 8, 128>}, {transform_indices = @transform_2, window_bounds = array<i64: 1, 8, 128>}, {pipeline_mode = #tpu.pipeline_mode<synchronous>, transform_indices = @transform_3, window_bounds = array<i64: 8, 8>}, {pipeline_mode = #tpu.pipeline_mode<synchronous>, transform_indices = @transform_4, window_bounds = array<i64: 8, 1>}, {transform_indices = @transform_5, window_bounds = array<i64: 1, 8, 8>}, {transform_indices = @transform_6, window_bounds = array<i64: 1, 8, 128>}]} {
    %c0_i32 = arith.constant 0 : i32
    %0 = arith.cmpi eq, %arg1, %c0_i32 : i32
    %1 = arith.extui %0 : i1 to i32
    %c0_i32_0 = arith.constant 0 : i32
    %2 = arith.cmpi ne, %1, %c0_i32_0 : i32
    scf.if %2 {
      %cst_28 = arith.constant 0.000000e+00 : f32
      %32 = vector.broadcast %cst_28 : f32 to vector<8x8xf32>
      %c0_29 = arith.constant 0 : index
      %c0_30 = arith.constant 0 : index
      %33 = vector.load %arg9[%c0_29, %c0_30] : memref<8x8xf32, #tpu.memory_space<vmem>>, vector<8x8xf32>
      tpu.vector_store %arg9[%c0_29, %c0_30], %32 {strides = array<i32>} : memref<8x8xf32, #tpu.memory_space<vmem>>, vector<8x8xf32>,
      %cst_31 = arith.constant 0.000000e+00 : f32
      %34 = vector.broadcast %cst_31 : f32 to vector<1x8xf32>
      %c0_32 = arith.constant 0 : index
      %c0_33 = arith.constant 0 : index
      %35 = vector.load %arg10[%c0_32, %c0_33] : memref<1x8xf32, #tpu.memory_space<vmem>>, vector<1x8xf32>
      tpu.vector_store %arg10[%c0_32, %c0_33], %34 {strides = array<i32>} : memref<1x8xf32, #tpu.memory_space<vmem>>, vector<1x8xf32>,
    } else {
    }
    %c0 = arith.constant 0 : index
    %c0_1 = arith.constant 0 : index
    %c0_2 = arith.constant 0 : index
    %3 = vector.load %arg3[%c0, %c0_1, %c0_2] : memref<1x8x128xf32, #tpu.memory_space<vmem>>, vector<1x8x128xf32>
    %4 = vector.shape_cast %3 : vector<1x8x128xf32> to vector<8x128xf32>
    %c0_3 = arith.constant 0 : index
    %c0_4 = arith.constant 0 : index
    %c0_5 = arith.constant 0 : index
    %5 = vector.load %arg4[%c0_3, %c0_4, %c0_5] : memref<1x8x128xf32, #tpu.memory_space<vmem>>, vector<1x8x128xf32>
    %6 = vector.shape_cast %5 : vector<1x8x128xf32> to vector<8x128xf32>
    %c0_6 = arith.constant 0 : index
    %c0_7 = arith.constant 0 : index
    %c0_8 = arith.constant 0 : index
    %7 = vector.load %arg2[%c0_6, %c0_7, %c0_8] : memref<1x8x1xf32, #tpu.memory_space<vmem>>, vector<1x8x1xf32>
    %8 = vector.shape_cast %7 : vector<1x8x1xf32> to vector<8x1xf32>
    %9 = vector.broadcast %8 : vector<8x1xf32> to vector<8x128xf32>
    %10 = arith.subf %6, %9 : vector<8x128xf32>
    %11 = math.exp %10 : vector<8x128xf32>
    %c0_9 = arith.constant 0 : index
    %c0_10 = arith.constant 0 : index
    %12 = vector.load %arg9[%c0_9, %c0_10] : memref<8x8xf32, #tpu.memory_space<vmem>>, vector<8x8xf32>
    %cst = arith.constant dense<0.000000e+00> : vector<8x8xf32>
    %13 = tpu.matmul %4, %11, %cst {dimension_numbers = #tpu.dot_dimension_numbers<[1], [1], [0], [0], [0, 0, 1, 0], [], []>} : vector<8x128xf32>, vector<8x128xf32>, vector<8x8xf32> -> vector<8x8xf32>
    %14 = arith.addf %12, %13 : vector<8x8xf32>
    %c0_11 = arith.constant 0 : index
    %c0_12 = arith.constant 0 : index
    %15 = vector.load %arg9[%c0_11, %c0_12] : memref<8x8xf32, #tpu.memory_space<vmem>>, vector<8x8xf32>
    tpu.vector_store %arg9[%c0_11, %c0_12], %14 {strides = array<i32>} : memref<8x8xf32, #tpu.memory_space<vmem>>, vector<8x8xf32>,
    %cst_13 = arith.constant 1.000000e+00 : f32
    %16 = vector.broadcast %cst_13 : f32 to vector<1x128xf32>
    %c0_14 = arith.constant 0 : index
    %c0_15 = arith.constant 0 : index
    %17 = vector.load %arg10[%c0_14, %c0_15] : memref<1x8xf32, #tpu.memory_space<vmem>>, vector<1x8xf32>
    %cst_16 = arith.constant dense<0.000000e+00> : vector<1x8xf32>
    %18 = tpu.matmul %16, %11, %cst_16 {dimension_numbers = #tpu.dot_dimension_numbers<[1], [1], [0], [0], [0, 0, 1, 0], [], []>} : vector<1x128xf32>, vector<8x128xf32>, vector<1x8xf32> -> vector<1x8xf32>
    %19 = arith.addf %17, %18 : vector<1x8xf32>
    %c0_17 = arith.constant 0 : index
    %c0_18 = arith.constant 0 : index
    %20 = vector.load %arg10[%c0_17, %c0_18] : memref<1x8xf32, #tpu.memory_space<vmem>>, vector<1x8xf32>
    tpu.vector_store %arg10[%c0_17, %c0_18], %19 {strides = array<i32>} : memref<1x8xf32, #tpu.memory_space<vmem>>, vector<1x8xf32>,
    %c0_19 = arith.constant 0 : index
    %c0_20 = arith.constant 0 : index
    %21 = vector.load %arg5[%c0_19, %c0_20] : memref<8x8xf32, #tpu.memory_space<vmem>>, vector<8x8xf32>
    %cst_21 = arith.constant dense<0.000000e+00> : vector<8x128xf32>
    %22 = tpu.matmul %21, %4, %cst_21 {dimension_numbers = #tpu.dot_dimension_numbers<[1], [0], [0], [1], [0, 0, 1, 1], [], []>} : vector<8x8xf32>, vector<8x128xf32>, vector<8x128xf32> -> vector<8x128xf32>
    %c0_22 = arith.constant 0 : index
    %c0_23 = arith.constant 0 : index
    %23 = vector.load %arg6[%c0_22, %c0_23] : memref<8x1xf32, #tpu.memory_space<vmem>>, vector<8x1xf32>
    %24 = vector.broadcast %23 : vector<8x1xf32> to vector<8x128xf32>
    %25 = arith.addf %22, %24 : vector<8x128xf32>
    %c0_24 = arith.constant 0 : index
    %c0_25 = arith.constant 0 : index
    %c0_26 = arith.constant 0 : index
    %26 = vector.load %arg8[%c0_24, %c0_25, %c0_26] : memref<1x8x128xf32, #tpu.memory_space<vmem>>, vector<1x8x128xf32>
    %27 = vector.shape_cast %26 : vector<1x8x128xf32> to vector<8x128xf32>
    %28 = vector.shape_cast %25 : vector<8x128xf32> to vector<1x8x128xf32>
    tpu.vector_store %arg8[%c0_24, %c0_25, %c0_26], %28 {strides = array<i32>} : memref<1x8x128xf32, #tpu.memory_space<vmem>>, vector<1x8x128xf32>,
    %c1_i32 = arith.constant 1 : i32
    %29 = arith.cmpi eq, %arg1, %c1_i32 : i32
    %30 = arith.extui %29 : i1 to i32
    %c0_i32_27 = arith.constant 0 : i32
    %31 = arith.cmpi ne, %30, %c0_i32_27 : i32
    scf.if %31 {
      %c0_28 = arith.constant 0 : index
      %c0_29 = arith.constant 0 : index
      %32 = vector.load %arg9[%c0_28, %c0_29] : memref<8x8xf32, #tpu.memory_space<vmem>>, vector<8x8xf32>
      %c0_30 = arith.constant 0 : index
      %c0_31 = arith.constant 0 : index
      %33 = vector.load %arg10[%c0_30, %c0_31] : memref<1x8xf32, #tpu.memory_space<vmem>>, vector<1x8xf32>
      %34 = tpu.reciprocal %33 {approx = true} : vector<1x8xf32> -> vector<1x8xf32>
      %35 = vector.broadcast %34 : vector<1x8xf32> to vector<8x8xf32>
      %36 = arith.mulf %32, %35 : vector<8x8xf32>
      %c0_32 = arith.constant 0 : index
      %c0_33 = arith.constant 0 : index
      %c0_34 = arith.constant 0 : index
      %37 = vector.load %arg7[%c0_32, %c0_33, %c0_34] : memref<1x8x8xf32, #tpu.memory_space<vmem>>, vector<1x8x8xf32>
      %38 = vector.shape_cast %37 : vector<1x8x8xf32> to vector<8x8xf32>
      %39 = vector.shape_cast %36 : vector<8x8xf32> to vector<1x8x8xf32>
      tpu.vector_store %arg7[%c0_32, %c0_33, %c0_34], %39 {strides = array<i32>} : memref<1x8x8xf32, #tpu.memory_space<vmem>>, vector<1x8x8xf32>,
    } else {
    }
    return
  }
  func.func @transform_0(%arg0: i32, %arg1: i32) -> (i32, i32, i32) {
    %c0_i32 = arith.constant 0 : i32
    %c0_i32_0 = arith.constant 0 : i32
    %c0_i32_1 = arith.constant 0 : i32
    return %arg0, %c0_i32, %c0_i32_0 : i32, i32, i32
  }
  func.func @transform_1(%arg0: i32, %arg1: i32) -> (i32, i32, i32) {
    %c0_i32 = arith.constant 0 : i32
    %c0_i32_0 = arith.constant 0 : i32
    return %arg0, %c0_i32, %arg1 : i32, i32, i32
  }
  func.func @transform_2(%arg0: i32, %arg1: i32) -> (i32, i32, i32) {
    %c0_i32 = arith.constant 0 : i32
    %c0_i32_0 = arith.constant 0 : i32
    return %arg0, %c0_i32, %arg1 : i32, i32, i32
  }
  func.func @transform_3(%arg0: i32, %arg1: i32) -> (i32, i32) {
    %c0_i32 = arith.constant 0 : i32
    %c0_i32_0 = arith.constant 0 : i32
    %c0_i32_1 = arith.constant 0 : i32
    return %c0_i32, %c0_i32_0 : i32, i32
  }
  func.func @transform_4(%arg0: i32, %arg1: i32) -> (i32, i32) {
    %c0_i32 = arith.constant 0 : i32
    %c0_i32_0 = arith.constant 0 : i32
    %c0_i32_1 = arith.constant 0 : i32
    return %c0_i32, %c0_i32_0 : i32, i32
  }
  func.func @transform_5(%arg0: i32, %arg1: i32) -> (i32, i32, i32) {
    %c0_i32 = arith.constant 0 : i32
    %c0_i32_0 = arith.constant 0 : i32
    %c0_i32_1 = arith.constant 0 : i32
    return %arg0, %c0_i32, %c0_i32_0 : i32, i32, i32
  }
  func.func @transform_6(%arg0: i32, %arg1: i32) -> (i32, i32, i32) {
    %c0_i32 = arith.constant 0 : i32
    %c0_i32_0 = arith.constant 0 : i32
    return %arg0, %c0_i32, %arg1 : i32, i32, i32
  }
}

</mosaic_0001>

<llo_original>
// kernel: tpu_custom_call.1
$region0: #{tpu_custom_call.1}
  #allocation0 [shape = 'u32[]', space=smem, size = 0x4, offset = 0x4, fixed_abs, tag = 'smem constant byte address 0x4 - core index']
  #allocation1 [shape = 'u32[144,128]{1,0:T(1,128)}', space=vmem, size = 0x12000, scoped, tag = 'internal scratch']
  #allocation2 [shape = 'f32[8,8]{1,0:T(8,128)}', space=vmem, size = 0x1000, scoped, tag = 'scratch operand']
  #allocation3 [shape = 'f32[1,8]{1,0:T(1,128)}', space=vmem, size = 0x200, scoped, tag = 'scratch operand']
  %s0 = inlined_call_operand.vmem [shape: f32[2,8,1], index: 0, kind: input, shape index: {}]
  %s1 = inlined_call_operand.hbm [shape: f32[2,8,256], index: 1, kind: input, shape index: {}]
  %s2 = inlined_call_operand.vmem [shape: f32[2,8,256], index: 2, kind: input, shape index: {}]
  %s3 = inlined_call_operand.hbm [shape: f32[8,8], index: 3, kind: input, shape index: {}]
  %s4 = inlined_call_operand.vmem [shape: f32[8,1], index: 4, kind: input, shape index: {}]
  %s5 = inlined_call_operand.hbm [shape: f32[2,8,8], index: 5, kind: output, shape index: {0}]
  %s6 = inlined_call_operand.hbm [shape: f32[2,8,256], index: 6, kind: output, shape index: {1}]
  %7 = xla_tuple %s5, %s6
  %s8 = sld [smem:[#allocation0]]
  $region77: #{tpu_custom_call.1} parent=0
    _
  %s10 = ssub.s32 1, %s8
  %s11 = scalar_select 0, %s10, %s8
  $region1: #{tpu_custom_call.1} parent=0
    #allocation4 [shape = 'u8[8192]{0}', space=vmem, size = 0x2000, scoped, tag = 'input window, operand 1']
    #allocation5 [shape = 's32[2]{0}', space=sflag, size = 0x8, scoped, tag = 'scoped memory for tpu_custom_call.1']
    #allocation6 [shape = 's32[2]{0}', space=sflag, size = 0x8, scoped, tag = 'scoped memory for tpu_custom_call.1']
    #allocation7 [shape = 'u8[4096]{0}', space=vmem, size = 0x1000, scoped, tag = 'input window, operand 3, single buffered']
    #allocation8 [shape = 's32[1]{0}', space=sflag, size = 0x4, scoped, tag = 'scoped memory for tpu_custom_call.1']
    #allocation9 [shape = 'u8[8192]{0}', space=vmem, size = 0x2000, scoped, tag = 'output window, operand 0']
    #allocation10 [shape = 'u8[8192]{0}', space=vmem, size = 0x2000, scoped, tag = 'output window, operand 1']
    #allocation11 [shape = 's32[2]{0}', space=sflag, size = 0x8, scoped, tag = 'scoped memory for tpu_custom_call.1']
    %12 = vsyncpa [#allocation5], 0
    %s13 = scalar_lea.sflag [#allocation5], 1
    %14 = vsyncpa %s13, 0
    %15 = vsyncpa [#allocation8], 0
    %16 = vsyncpa [#allocation6], 0
    %s17 = scalar_lea.sflag [#allocation6], 1
    %18 = vsyncpa %s17, 0
    %19 = vsyncpa [#allocation11], 0
    %s20 = scalar_lea.sflag [#allocation11], 1
    %21 = vsyncpa %s20, 0
    loop: start=0, step=1, limit=6
    $region2: #{tpu_custom_call.1} parent=1 // loop_pre_header
      _
    $region3: #{tpu_custom_call.1} parent=1 // loop_header
      %s23 = sphi 0, %s27
      %p24 = scmp.ge.s32.totalorder %s23, 6
      %s30 = sphi 0, %s42
      %s31 = sphi 0, %s38
      %s32 = sphi 0, %s30
      %s33 = sphi 0, %s31
      %s34 = sphi 0, %s32
      %s35 = sphi 0, %s33
      %s45 = sphi 0, %s47
      %s48 = sphi 0, %s45
      %s49 = sphi 0, %s48
      %s65 = sphi 0, %s49
      %s73 = sphi 0, %s75
      %s76 = sphi 0, %s73
      %s77 = sphi 0, %s76
      %s93 = sphi 0, %s77
      %s101 = sphi 0, %s103
      %s104 = sphi 0, %s101
      %s105 = sphi 0, %s104
      %s121 = sphi 0, %s105
      %s125 = sphi 0, %s125
      %s127 = sphi 0, %s125
      %s128 = sphi 0, %s127
      %s142 = sphi 0, %s128
      %s146 = sphi 0, %s146
      %s148 = sphi 0, %s146
      %s149 = sphi 0, %s148
      %s163 = sphi 0, %s149
      %s169 = sphi 0, %s171
      %s172 = sphi 0, %s169
      %s173 = sphi 0, %s172
      %s189 = sphi 0, %s173
      %s197 = sphi 0, %s199
      %s200 = sphi 0, %s197
      %s201 = sphi 0, %s200
      %s217 = sphi 0, %s201
    $region4: #{tpu_custom_call.1} parent=1 // loop_header_branch
      %26 = sbr.rel (%p24) target = $region8
    $region5: #{tpu_custom_call.1} parent=1 // loop_body
      %s28 = ssub.s32 %s23, 1
      %s29 = ssub.s32 %s23, 2
      %s36 = sadd.s32 1, %s31
      %p37 = scmp.ge.s32.totalorder %s36, 2
      %s38 = scalar_select %p37, 0, %s36
      %s39 = sadd.s32 1, %s30
      %s40 = scalar_select %p37, %s39, %s30
      %p41 = scmp.ge.s32.totalorder %s40, 2
      %s42 = scalar_select %p41, 0, %s40
      %s43 = ssub.s32 %s30, %s42
      %p44 = scmp.eq.s32.totalorder %s43, 0
      %s46 = sadd.s32 %s45, 1
      %s47 = scalar_select %p44, %s45, %s46
      %p50 = pneg %p44
      %p51 = scmp.eq.s32.totalorder %s23, 3
      %p52 = por %p50, %p51
      %p53 = scmp.ne.s32.totalorder %s45, %s48
      %p54 = scmp.eq.s32.totalorder %s23, 0
      %p55 = por %p53, %p54
      %p56 = scmp.ne.s32.totalorder %s45, %s48
      %p57 = scmp.eq.s32.totalorder %s28, 3
      %p58 = por %p56, %p57
      %p59 = scmp.ne.s32.totalorder %s48, %s49
      %p60 = scmp.eq.s32.totalorder %s28, 0
      %p61 = por %p59, %p60
      %p62 = scmp.ne.s32.totalorder %s48, %s49
      %p63 = scmp.eq.s32.totalorder %s29, 3
      %p64 = por %p62, %p63
      %p66 = scmp.ne.s32.totalorder %s49, %s65
      %p67 = scmp.eq.s32.totalorder %s29, 0
      %p68 = por %p66, %p67
      %s69 = ssub.s32 %s30, %s42
      %s70 = ssub.s32 %s31, %s38
      %s71 = sor.u32 %s69, %s70
      %p72 = scmp.eq.s32.totalorder %s71, 0
      %s74 = sadd.s32 %s73, 1
      %s75 = scalar_select %p72, %s73, %s74
      %p78 = pneg %p72
      %p79 = scmp.eq.s32.totalorder %s23, 3
      %p80 = por %p78, %p79
      %p81 = scmp.ne.s32.totalorder %s73, %s76
      %p82 = scmp.eq.s32.totalorder %s23, 0
      %p83 = por %p81, %p82
      %p84 = scmp.ne.s32.totalorder %s73, %s76
      %p85 = scmp.eq.s32.totalorder %s28, 3
      %p86 = por %p84, %p85
      %p87 = scmp.ne.s32.totalorder %s76, %s77
      %p88 = scmp.eq.s32.totalorder %s28, 0
      %p89 = por %p87, %p88
      %p90 = scmp.ne.s32.totalorder %s76, %s77
      %p91 = scmp.eq.s32.totalorder %s29, 3
      %p92 = por %p90, %p91
      %p94 = scmp.ne.s32.totalorder %s77, %s93
      %p95 = scmp.eq.s32.totalorder %s29, 0
      %p96 = por %p94, %p95
      %s97 = ssub.s32 %s30, %s42
      %s98 = ssub.s32 %s31, %s38
      %s99 = sor.u32 %s97, %s98
      %p100 = scmp.eq.s32.totalorder %s99, 0
      %s102 = sadd.s32 %s101, 1
      %s103 = scalar_select %p100, %s101, %s102
      %p106 = pneg %p100
      %p107 = scmp.eq.s32.totalorder %s23, 3
      %p108 = por %p106, %p107
      %p109 = scmp.ne.s32.totalorder %s101, %s104
      %p110 = scmp.eq.s32.totalorder %s23, 0
      %p111 = por %p109, %p110
      %p112 = scmp.ne.s32.totalorder %s101, %s104
      %p113 = scmp.eq.s32.totalorder %s28, 3
      %p114 = por %p112, %p113
      %p115 = scmp.ne.s32.totalorder %s104, %s105
      %p116 = scmp.eq.s32.totalorder %s28, 0
      %p117 = por %p115, %p116
      %p118 = scmp.ne.s32.totalorder %s104, %s105
      %p119 = scmp.eq.s32.totalorder %s29, 3
      %p120 = por %p118, %p119
      %p122 = scmp.ne.s32.totalorder %s105, %s121
      %p123 = scmp.eq.s32.totalorder %s29, 0
      %p124 = por %p122, %p123
      %s126 = sadd.s32 %s125, 1
      %p129 = scmp.eq.s32.totalorder %s23, 3
      %p130 = scmp.ne.s32.totalorder %s125, %s127
      %p131 = scmp.eq.s32.totalorder %s23, 0
      %p132 = por %p130, %p131
      %p133 = scmp.ne.s32.totalorder %s125, %s127
      %p134 = scmp.eq.s32.totalorder %s28, 3
      %p135 = por %p133, %p134
      %p136 = scmp.ne.s32.totalorder %s127, %s128
      %p137 = scmp.eq.s32.totalorder %s28, 0
      %p138 = por %p136, %p137
      %p139 = scmp.ne.s32.totalorder %s127, %s128
      %p140 = scmp.eq.s32.totalorder %s29, 3
      %p141 = por %p139, %p140
      %p143 = scmp.ne.s32.totalorder %s128, %s142
      %p144 = scmp.eq.s32.totalorder %s29, 0
      %p145 = por %p143, %p144
      %s147 = sadd.s32 %s146, 1
      %p150 = scmp.eq.s32.totalorder %s23, 3
      %p151 = scmp.ne.s32.totalorder %s146, %s148
      %p152 = scmp.eq.s32.totalorder %s23, 0
      %p153 = por %p151, %p152
      %p154 = scmp.ne.s32.totalorder %s146, %s148
      %p155 = scmp.eq.s32.totalorder %s28, 3
      %p156 = por %p154, %p155
      %p157 = scmp.ne.s32.totalorder %s148, %s149
      %p158 = scmp.eq.s32.totalorder %s28, 0
      %p159 = por %p157, %p158
      %p160 = scmp.ne.s32.totalorder %s148, %s149
      %p161 = scmp.eq.s32.totalorder %s29, 3
      %p162 = por %p160, %p161
      %p164 = scmp.ne.s32.totalorder %s149, %s163
      %p165 = scmp.eq.s32.totalorder %s29, 0
      %p166 = por %p164, %p165
      %s167 = ssub.s32 %s30, %s42
      %p168 = scmp.eq.s32.totalorder %s167, 0
      %s170 = sadd.s32 %s169, 1
      %s171 = scalar_select %p168, %s169, %s170
      %p174 = pneg %p168
      %p175 = scmp.eq.s32.totalorder %s23, 3
      %p176 = por %p174, %p175
      %p177 = scmp.ne.s32.totalorder %s169, %s172
      %p178 = scmp.eq.s32.totalorder %s23, 0
      %p179 = por %p177, %p178
      %p180 = scmp.ne.s32.totalorder %s169, %s172
      %p181 = scmp.eq.s32.totalorder %s28, 3
      %p182 = por %p180, %p181
      %p183 = scmp.ne.s32.totalorder %s172, %s173
      %p184 = scmp.eq.s32.totalorder %s28, 0
      %p185 = por %p183, %p184
      %p186 = scmp.ne.s32.totalorder %s172, %s173
      %p187 = scmp.eq.s32.totalorder %s29, 3
      %p188 = por %p186, %p187
      %p190 = scmp.ne.s32.totalorder %s173, %s189
      %p191 = scmp.eq.s32.totalorder %s29, 0
      %p192 = por %p190, %p191
      %s193 = ssub.s32 %s30, %s42
      %s194 = ssub.s32 %s31, %s38
      %s195 = sor.u32 %s193, %s194
      %p196 = scmp.eq.s32.totalorder %s195, 0
      %s198 = sadd.s32 %s197, 1
      %s199 = scalar_select %p196, %s197, %s198
      %p202 = pneg %p196
      %p203 = scmp.eq.s32.totalorder %s23, 3
      %p204 = por %p202, %p203
      %p205 = scmp.ne.s32.totalorder %s197, %s200
      %p206 = scmp.eq.s32.totalorder %s23, 0
      %p207 = por %p205, %p206
      %p208 = scmp.ne.s32.totalorder %s197, %s200
      %p209 = scmp.eq.s32.totalorder %s28, 3
      %p210 = por %p208, %p209
      %p211 = scmp.ne.s32.totalorder %s200, %s201
      %p212 = scmp.eq.s32.totalorder %s28, 0
      %p213 = por %p211, %p212
      %p214 = scmp.ne.s32.totalorder %s200, %s201
      %p215 = scmp.eq.s32.totalorder %s29, 3
      %p216 = por %p214, %p215
      %p218 = scmp.ne.s32.totalorder %s201, %s217
      %p219 = scmp.eq.s32.totalorder %s29, 0
      %p220 = por %p218, %p219
      %p221 = scmp.le.s32.totalorder 1, %s23
      %p222 = scmp.lt.s32.totalorder %s23, 5
      %p223 = pnand %p221, %p222
      %p224 = pneg %p223
      // Predicated region
      $region9: #{tpu_custom_call.1} parent=5 // pred_check
        _
      $region10: #{tpu_custom_call.1} parent=5 // pred_check_branch
        %226 = sbr.rel (%p223) target = $region12
      $region11: #{tpu_custom_call.1} parent=5 // pred_region
        %s227 = ssub.s32 %s23, 1
        // Predicated region
        $region13: #{tpu_custom_call.1} parent=11 // pred_check
          %p228 = pneg %p138
        $region14: #{tpu_custom_call.1} parent=11 // pred_check_branch
          %230 = sbr.rel (%p228) target = $region16
        $region15: #{tpu_custom_call.1} parent=11 // pred_region
          %s232 = ssub.s32 128, 128
          %233 = vsyncadd [#allocation8], %s232
          %s235 = sshll.u32 [#allocation7], 4
          %s236 = int_to_ptr.vmem [resolvable:$true] %s235
          %238 = dma.hbm_to_vmem [thread:$0]  %s3, 128, %s236, [#allocation8]
        $region16: #{tpu_custom_call.1} parent=11 // pred_fallthru
          _
        // Predicated region
        $region17: #{tpu_custom_call.1} parent=11 // pred_check
          %p239 = pneg %p159
        $region18: #{tpu_custom_call.1} parent=11 // pred_check_branch
          %241 = sbr.rel (%p239) target = $region20
        $region19: #{tpu_custom_call.1} parent=11 // pred_region
          _
        $region20: #{tpu_custom_call.1} parent=11 // pred_fallthru
          _
      $region12: #{tpu_custom_call.1} parent=5 // pred_fallthru
        _
      %p242 = scmp.lt.s32.totalorder %s23, 4
      // Predicated region
      $region21: #{tpu_custom_call.1} parent=5 // pred_check
        %p243 = pneg %p242
      $region22: #{tpu_custom_call.1} parent=5 // pred_check_branch
        %245 = sbr.rel (%p243) target = $region24
      $region23: #{tpu_custom_call.1} parent=5 // pred_region
        // Predicated region
        $region25: #{tpu_custom_call.1} parent=23 // pred_check
          %p246 = pneg %p55
        $region26: #{tpu_custom_call.1} parent=23 // pred_check_branch
          %248 = sbr.rel (%p246) target = $region28
        $region27: #{tpu_custom_call.1} parent=23 // pred_region
          %p249 = scmp.lt.s32.totalorder %s30, 1
          %s250 = scalar_select %p249, %s30, 1
          %s251 = smul.addr %s250, 8
          %s252 = scalar_lea.vmem %s0, %s251
        $region28: #{tpu_custom_call.1} parent=23 // pred_fallthru
          _
        // Predicated region
        $region29: #{tpu_custom_call.1} parent=23 // pred_check
          %p253 = pneg %p83
        $region30: #{tpu_custom_call.1} parent=23 // pred_check_branch
          %255 = sbr.rel (%p253) target = $region32
        $region31: #{tpu_custom_call.1} parent=23 // pred_region
          %s256 = sand.u32 %s73, 1
          %s257 = scalar_lea.sflag [#allocation5], %s256
          %s258 = sand.u32 %s73, 1
          %s259 = smul.addr %s258, 8
          %s260 = scalar_lea.vmem [#allocation4], %s259
          %s262 = ssub.s32 128, 128
          %263 = vsyncadd %s257, %s262
          %s264 = smul.addr %s30, 2
          %s265 = sadd.s32 %s31, %s264
          %s266 = smul.addr %s265, 128
          %s267 = scalar_lea.hbm %s1, %s266
          %s269 = sshll.u32 %s260, 4
          %s270 = int_to_ptr.vmem [resolvable:$true] %s269
          %272 = dma.hbm_to_vmem [thread:$0]  %s267, 128, %s270, %s257
        $region32: #{tpu_custom_call.1} parent=23 // pred_fallthru
          _
        // Predicated region
        $region33: #{tpu_custom_call.1} parent=23 // pred_check
          %p273 = pneg %p111
        $region34: #{tpu_custom_call.1} parent=23 // pred_check_branch
          %275 = sbr.rel (%p273) target = $region36
        $region35: #{tpu_custom_call.1} parent=23 // pred_region
          %p276 = scmp.lt.s32.totalorder %s30, 1
          %s277 = scalar_select %p276, %s30, 1
          %p278 = scmp.lt.s32.totalorder %s31, 1
          %s279 = scalar_select %p278, %s31, 1
          %s280 = smul.addr %s277, 2
          %s281 = sadd.s32 %s279, %s280
          %s282 = smul.addr %s281, 8
          %s283 = scalar_lea.vmem %s2, %s282
        $region36: #{tpu_custom_call.1} parent=23 // pred_fallthru
          _
      $region24: #{tpu_custom_call.1} parent=5 // pred_fallthru
        _
      %p284 = scmp.le.s32.totalorder 1, %s23
      %p285 = scmp.lt.s32.totalorder %s23, 5
      %p286 = pnand %p284, %p285
      %p287 = pneg %p286
      // Predicated region
      $region37: #{tpu_custom_call.1} parent=5 // pred_check
        _
      $region38: #{tpu_custom_call.1} parent=5 // pred_check_branch
        %289 = sbr.rel (%p286) target = $region40
      $region39: #{tpu_custom_call.1} parent=5 // pred_region
        %s290 = ssub.s32 %s23, 1
        %s291 = sand.u32 %s76, 1
        %s292 = scalar_lea.sflag [#allocation5], %s291
        %s293 = sand.u32 %s76, 1
        %s294 = smul.addr %s293, 8
        %s295 = scalar_lea.vmem [#allocation4], %s294
        // Predicated region
        $region41: #{tpu_custom_call.1} parent=39 // pred_check
          %p296 = pneg %p89
        $region42: #{tpu_custom_call.1} parent=39 // pred_check_branch
          %298 = sbr.rel (%p296) target = $region44
        $region43: #{tpu_custom_call.1} parent=39 // pred_region
          %299 = dma.done %s292, 128
        $region44: #{tpu_custom_call.1} parent=39 // pred_fallthru
          _
        // Predicated region
        $region45: #{tpu_custom_call.1} parent=39 // pred_check
          %p300 = pneg %p138
        $region46: #{tpu_custom_call.1} parent=39 // pred_check_branch
          %302 = sbr.rel (%p300) target = $region48
        $region47: #{tpu_custom_call.1} parent=39 // pred_region
          %303 = dma.done [#allocation8], 128
        $region48: #{tpu_custom_call.1} parent=39 // pred_fallthru
          _
        %p304 = scmp.lt.s32.totalorder %s32, 1
        %s305 = scalar_select %p304, %s32, 1
        %s306 = smul.addr %s305, 8
        %s307 = scalar_lea.vmem %s0, %s306
        %p308 = pneg %p61
        %p309 = pneg %p58
        %s310 = sand.u32 %s76, 1
        %s311 = scalar_lea.sflag [#allocation5], %s310
        %s312 = sand.u32 %s76, 1
        %s313 = smul.addr %s312, 8
        %s314 = scalar_lea.vmem [#allocation4], %s313
        %p315 = pneg %p89
        %p316 = pneg %p86
        %p317 = scmp.lt.s32.totalorder %s32, 1
        %s318 = scalar_select %p317, %s32, 1
        %p319 = scmp.lt.s32.totalorder %s33, 1
        %s320 = scalar_select %p319, %s33, 1
        %s321 = smul.addr %s318, 2
        %s322 = sadd.s32 %s320, %s321
        %s323 = smul.addr %s322, 8
        %s324 = scalar_lea.vmem %s2, %s323
        %p325 = pneg %p117
        %p326 = pneg %p114
        %p327 = pneg %p138
        %p328 = pneg %p135
        %p329 = pneg %p159
        %p330 = pneg %p156
        %p331 = pneg %p185
        %p332 = pneg %p182
        %s333 = sand.u32 %s172, 1
        %s334 = scalar_lea.sflag [#allocation6], %s333
        %s335 = sand.u32 %s172, 1
        %s336 = smul.addr %s335, 8
        %s337 = scalar_lea.vmem [#allocation9], %s336
        %p338 = pneg %p213
        %p339 = pneg %p210
        %s340 = sand.u32 %s200, 1
        %s341 = scalar_lea.sflag [#allocation11], %s340
        %s342 = sand.u32 %s200, 1
        %s343 = smul.addr %s342, 8
        %s344 = scalar_lea.vmem [#allocation10], %s343
        %p345 = scmp.lt.s32.totalorder %s32, 1
        %s346 = scalar_select %p345, %s32, 1
        %s347 = smul.addr %s346, 8
        %s348 = scalar_lea.vmem %s0, %s347
        %p349 = scmp.lt.s32.totalorder %s32, 1
        %s350 = scalar_select %p349, %s32, 1
        %p351 = scmp.lt.s32.totalorder %s33, 1
        %s352 = scalar_select %p351, %s33, 1
        %s353 = smul.addr %s350, 2
        %s354 = sadd.s32 %s352, %s353
        %s355 = smul.addr %s354, 8
        %s356 = scalar_lea.vmem %s2, %s355
        %p357 = scmp.eq.s32.totalorder %s33, 0
        // Predicated region
        $region49: #{tpu_custom_call.1} parent=39 // pred_check
          %p358 = pneg %p357
        $region50: #{tpu_custom_call.1} parent=39 // pred_check_branch
          %360 = sbr.rel (%p358) target = $region52
        $region51: #{tpu_custom_call.1} parent=39 // pred_region
          %vm361 = vcmask 64512
          %362 = vst.msk [vmem:[#allocation2] sm:$0xff] %vm361, 0.0
          %vm363 = vcmask 57344
          %364 = vst.msk [vmem:[#allocation3] sm:$0x1] %vm363, 0.0
        $region52: #{tpu_custom_call.1} parent=39 // pred_fallthru
          _
        %v365 = vld [vmem:[%s295] sm:$0xff]
        %v366 = vld [vmem:[%s356] sm:$0xff]
        %v367 = vld [vmem:[%s348] sm:$0xff]
        %369 = vset.pattern.permute.xlu0 0
        %370 = vperm.xlu0 %369, %v367
        %v371 = vpop.permute.xlu0 %370
        %v373 = vsub.f32 %v366, %v371
        %v374 = vmul.f32 %v373, 1.442695
        %v375 = vpow.pop %v374
        %v376 = vld [vmem:[#allocation2] sm:$0xff]
        %377 = vmatprep.subr.mxu0 0.0
        %378 = vmatpush1.xpose.msra.mxu0 %v375
        %379 = vmatprep.subr.mxu0 0.0
        %380 = vmatpush1.xpose.msra.mxu0 0.0
        %381 = vmatprep.subr.mxu0 0.0
        %382 = vmatpush1.xpose.msra.mxu0 0.0
        %383 = vmatprep.subr.mxu0 0.0
        %384 = vmatpush1.xpose.msra.mxu0 0.0
        %385 = vmatprep.subr.mxu0 0.0
        %386 = vmatpush1.xpose.msra.mxu0 0.0
        %387 = vmatprep.subr.mxu0 0.0
        %388 = vmatpush1.xpose.msra.mxu0 0.0
        %389 = vmatprep.subr.mxu0 0.0
        %390 = vmatpush1.xpose.msra.mxu0 0.0
        %391 = vmatprep.subr.mxu0 0.0
        %392 = vmatpush1.xpose.msra.mxu0 0.0
        %393 = vmatprep.subr.mxu0 0.0
        %394 = vmatpush1.xpose.msra.mxu0 0.0
        %395 = vmatprep.subr.mxu0 0.0
        %396 = vmatpush1.xpose.msra.mxu0 0.0
        %397 = vmatprep.subr.mxu0 0.0
        %398 = vmatpush1.xpose.msra.mxu0 0.0
        %399 = vmatprep.subr.mxu0 0.0
        %400 = vmatpush1.xpose.msra.mxu0 0.0
        %401 = vmatprep.subr.mxu0 0.0
        %402 = vmatpush1.xpose.msra.mxu0 0.0
        %403 = vmatprep.subr.mxu0 0.0
        %404 = vmatpush1.xpose.msra.mxu0 0.0
        %405 = vmatprep.subr.mxu0 0.0
        %406 = vmatpush1.xpose.msra.mxu0 0.0
        %407 = vmatprep.subr.mxu0 0.0
        %408 = vmatpush1.xpose.msra.mxu0 0.0
        %409 = vmatprep.subr.mxu0 0.0
        %410 = vmatpush1.xpose.msra.mxu0 0.0
        %411 = vmatprep.subr.mxu0 0.0
        %412 = vmatpush1.xpose.msra.mxu0 0.0
        %413 = vmatprep.subr.mxu0 0.0
        %414 = vmatpush1.xpose.msra.mxu0 0.0
        %415 = vmatprep.subr.mxu0 0.0
        %416 = vmatpush1.xpose.msra.mxu0 0.0
        %417 = vmatprep.subr.mxu0 0.0
        %418 = vmatpush1.xpose.msra.mxu0 0.0
        %419 = vmatprep.subr.mxu0 0.0
        %420 = vmatpush1.xpose.msra.mxu0 0.0
        %421 = vmatprep.subr.mxu0 0.0
        %422 = vmatpush1.xpose.msra.mxu0 0.0
        %423 = vmatprep.subr.mxu0 0.0
        %424 = vmatpush1.xpose.msra.mxu0 0.0
        %425 = vmatprep.subr.mxu0 0.0
        %426 = vmatpush1.xpose.msra.mxu0 0.0
        %427 = vmatprep.subr.mxu0 0.0
        %428 = vmatpush1.xpose.msra.mxu0 0.0
        %429 = vmatprep.subr.mxu0 0.0
        %430 = vmatpush1.xpose.msra.mxu0 0.0
        %431 = vmatprep.subr.mxu0 0.0
        %432 = vmatpush1.xpose.msra.mxu0 0.0
        %433 = vmatprep.subr.mxu0 0.0
        %434 = vmatpush1.xpose.msra.mxu0 0.0
        %435 = vmatprep.subr.mxu0 0.0
        %436 = vmatpush1.xpose.msra.mxu0 0.0
        %437 = vmatprep.subr.mxu0 0.0
        %438 = vmatpush1.xpose.msra.mxu0 0.0
        %439 = vmatprep.subr.mxu0 0.0
        %440 = vmatpush1.xpose.msra.mxu0 0.0
        %441 = vmatprep.mubr.f32.mxu0 0.0
        %442 = vmatmul.mubr.f32.gmra.mrb[0].mxu0 %v365
        %v443 = vpop.f32.mrb[0].mxu0
        %v444 = vadd.f32 0.0, %v443
        %v445 = vpop.f32.mrb[0].mxu0
        %446 = vdwg.mxu0
        %v447 = vadd.f32 %v376, %v444
        %vm448 = vcmask 64512
        %449 = vst.msk [vmem:[#allocation2] sm:$0xff] %vm448, %v447
        %v450 = vld [vmem:[#allocation3] sm:$0x1]
        %451 = vmatprep.subr.mxu0 0.0
        %452 = vmatpush1.xpose.msra.mxu0 %v375
        %453 = vmatprep.subr.mxu0 0.0
        %454 = vmatpush1.xpose.msra.mxu0 0.0
        %455 = vmatprep.subr.mxu0 0.0
        %456 = vmatpush1.xpose.msra.mxu0 0.0
        %457 = vmatprep.subr.mxu0 0.0
        %458 = vmatpush1.xpose.msra.mxu0 0.0
        %459 = vmatprep.subr.mxu0 0.0
        %460 = vmatpush1.xpose.msra.mxu0 0.0
        %461 = vmatprep.subr.mxu0 0.0
        %462 = vmatpush1.xpose.msra.mxu0 0.0
        %463 = vmatprep.subr.mxu0 0.0
        %464 = vmatpush1.xpose.msra.mxu0 0.0
        %465 = vmatprep.subr.mxu0 0.0
        %466 = vmatpush1.xpose.msra.mxu0 0.0
        %467 = vmatprep.subr.mxu0 0.0
        %468 = vmatpush1.xpose.msra.mxu0 0.0
        %469 = vmatprep.subr.mxu0 0.0
        %470 = vmatpush1.xpose.msra.mxu0 0.0
        %471 = vmatprep.subr.mxu0 0.0
        %472 = vmatpush1.xpose.msra.mxu0 0.0
        %473 = vmatprep.subr.mxu0 0.0
        %474 = vmatpush1.xpose.msra.mxu0 0.0
        %475 = vmatprep.subr.mxu0 0.0
        %476 = vmatpush1.xpose.msra.mxu0 0.0
        %477 = vmatprep.subr.mxu0 0.0
        %478 = vmatpush1.xpose.msra.mxu0 0.0
        %479 = vmatprep.subr.mxu0 0.0
        %480 = vmatpush1.xpose.msra.mxu0 0.0
        %481 = vmatprep.subr.mxu0 0.0
        %482 = vmatpush1.xpose.msra.mxu0 0.0
        %483 = vmatprep.subr.mxu0 0.0
        %484 = vmatpush1.xpose.msra.mxu0 0.0
        %485 = vmatprep.subr.mxu0 0.0
        %486 = vmatpush1.xpose.msra.mxu0 0.0
        %487 = vmatprep.subr.mxu0 0.0
        %488 = vmatpush1.xpose.msra.mxu0 0.0
        %489 = vmatprep.subr.mxu0 0.0
        %490 = vmatpush1.xpose.msra.mxu0 0.0
        %491 = vmatprep.subr.mxu0 0.0
        %492 = vmatpush1.xpose.msra.mxu0 0.0
        %493 = vmatprep.subr.mxu0 0.0
        %494 = vmatpush1.xpose.msra.mxu0 0.0
        %495 = vmatprep.subr.mxu0 0.0
        %496 = vmatpush1.xpose.msra.mxu0 0.0
        %497 = vmatprep.subr.mxu0 0.0
        %498 = vmatpush1.xpose.msra.mxu0 0.0
        %499 = vmatprep.subr.mxu0 0.0
        %500 = vmatpush1.xpose.msra.mxu0 0.0
        %501 = vmatprep.subr.mxu0 0.0
        %502 = vmatpush1.xpose.msra.mxu0 0.0
        %503 = vmatprep.subr.mxu0 0.0
        %504 = vmatpush1.xpose.msra.mxu0 0.0
        %505 = vmatprep.subr.mxu0 0.0
        %506 = vmatpush1.xpose.msra.mxu0 0.0
        %507 = vmatprep.subr.mxu0 0.0
        %508 = vmatpush1.xpose.msra.mxu0 0.0
        %509 = vmatprep.subr.mxu0 0.0
        %510 = vmatpush1.xpose.msra.mxu0 0.0
        %511 = vmatprep.subr.mxu0 0.0
        %512 = vmatpush1.xpose.msra.mxu0 0.0
        %513 = vmatprep.subr.mxu0 0.0
        %514 = vmatpush1.xpose.msra.mxu0 0.0
        %515 = vmatprep.mubr.f32.mxu0 0.0
        %516 = vmatmul.mubr.f32.gmra.mrb[0].mxu0 1.0
        %v517 = vpop.f32.mrb[0].mxu0
        %v518 = vadd.f32 0.0, %v517
        %v519 = vpop.f32.mrb[0].mxu0
        %520 = vdwg.mxu0
        %v521 = vadd.f32 %v450, %v518
        %vm522 = vcmask 57344
        %523 = vst.msk [vmem:[#allocation3] sm:$0x1] %vm522, %v521
        %v524 = vld [vmem:[#allocation7] sm:$0xff]
        %v525 = vld [vmem:[%s4] sm:$0xff]
        %527 = vset.pattern.permute.xlu0 0
        %528 = vperm.xlu0 %527, %v525
        %v529 = vpop.permute.xlu0 %528
        %v532 = vsel %vm448, %v524, 0
        %534 = vmatprep.subr.mxu0 0.0
        %535 = vmatpush1.msra.mxu0 %v365
        %536 = vmatprep.subr.mxu0 0.0
        %537 = vmatpush1.msra.mxu0 0.0
        %538 = vmatprep.subr.mxu0 0.0
        %539 = vmatpush1.msra.mxu0 0.0
        %540 = vmatprep.subr.mxu0 0.0
        %541 = vmatpush1.msra.mxu0 0.0
        %542 = vmatprep.subr.mxu0 0.0
        %543 = vmatpush1.msra.mxu0 0.0
        %544 = vmatprep.subr.mxu0 0.0
        %545 = vmatpush1.msra.mxu0 0.0
        %546 = vmatprep.subr.mxu0 0.0
        %547 = vmatpush1.msra.mxu0 0.0
        %548 = vmatprep.subr.mxu0 0.0
        %549 = vmatpush1.msra.mxu0 0.0
        %550 = vmatprep.subr.mxu0 0.0
        %551 = vmatpush1.msra.mxu0 0.0
        %552 = vmatprep.subr.mxu0 0.0
        %553 = vmatpush1.msra.mxu0 0.0
        %554 = vmatprep.subr.mxu0 0.0
        %555 = vmatpush1.msra.mxu0 0.0
        %556 = vmatprep.subr.mxu0 0.0
        %557 = vmatpush1.msra.mxu0 0.0
        %558 = vmatprep.subr.mxu0 0.0
        %559 = vmatpush1.msra.mxu0 0.0
        %560 = vmatprep.subr.mxu0 0.0
        %561 = vmatpush1.msra.mxu0 0.0
        %562 = vmatprep.subr.mxu0 0.0
        %563 = vmatpush1.msra.mxu0 0.0
        %564 = vmatprep.subr.mxu0 0.0
        %565 = vmatpush1.msra.mxu0 0.0
        %566 = vmatprep.subr.mxu0 0.0
        %567 = vmatpush1.msra.mxu0 0.0
        %568 = vmatprep.subr.mxu0 0.0
        %569 = vmatpush1.msra.mxu0 0.0
        %570 = vmatprep.subr.mxu0 0.0
        %571 = vmatpush1.msra.mxu0 0.0
        %572 = vmatprep.subr.mxu0 0.0
        %573 = vmatpush1.msra.mxu0 0.0
        %574 = vmatprep.subr.mxu0 0.0
        %575 = vmatpush1.msra.mxu0 0.0
        %576 = vmatprep.subr.mxu0 0.0
        %577 = vmatpush1.msra.mxu0 0.0
        %578 = vmatprep.subr.mxu0 0.0
        %579 = vmatpush1.msra.mxu0 0.0
        %580 = vmatprep.subr.mxu0 0.0
        %581 = vmatpush1.msra.mxu0 0.0
        %582 = vmatprep.subr.mxu0 0.0
        %583 = vmatpush1.msra.mxu0 0.0
        %584 = vmatprep.subr.mxu0 0.0
        %585 = vmatpush1.msra.mxu0 0.0
        %586 = vmatprep.subr.mxu0 0.0
        %587 = vmatpush1.msra.mxu0 0.0
        %588 = vmatprep.subr.mxu0 0.0
        %589 = vmatpush1.msra.mxu0 0.0
        %590 = vmatprep.subr.mxu0 0.0
        %591 = vmatpush1.msra.mxu0 0.0
        %592 = vmatprep.subr.mxu0 0.0
        %593 = vmatpush1.msra.mxu0 0.0
        %594 = vmatprep.subr.mxu0 0.0
        %595 = vmatpush1.msra.mxu0 0.0
        %596 = vmatprep.subr.mxu0 0.0
        %597 = vmatpush1.msra.mxu0 0.0
        %598 = vmatprep.mubr.f32.mxu0 0.0
        %599 = vmatmul.mubr.f32.gmra.mrb[0].mxu0 %v532
        %v600 = vpop.f32.mrb[0].mxu0
        %v601 = vadd.f32 %v529, %v600
        %v602 = vpop.f32.mrb[0].mxu0
        %603 = vdwg.mxu0
        %604 = vst [vmem:[%s344] sm:$0xff] %v601
        %p605 = scmp.eq.s32.totalorder %s33, 1
        // Predicated region
        $region53: #{tpu_custom_call.1} parent=39 // pred_check
          %p606 = pneg %p605
        $region54: #{tpu_custom_call.1} parent=39 // pred_check_branch
          %608 = sbr.rel (%p606) target = $region56
        $region55: #{tpu_custom_call.1} parent=39 // pred_region
          %v609 = vld [vmem:[#allocation2] sm:$0xff]
          %v610 = vld [vmem:[#allocation3] sm:$0x1]
          %v611 = vrcp.pop %v610
          %v613 = vlaneseq
          %v614 = vshrl.u32 %v613, 7
          %v615 = vsub.s32 0, %v614
          %v616 = vrot.slane %v611, %v615
          %v618 = vmul.f32 %v609, %v616
          %619 = vst.msk [vmem:[%s337] sm:$0xff] %vm448, %v618
        $region56: #{tpu_custom_call.1} parent=39 // pred_fallthru
          _
        %s620 = sand.u32 %s172, 1
        %s621 = scalar_lea.sflag [#allocation6], %s620
        %s622 = sand.u32 %s172, 1
        %s623 = smul.addr %s622, 8
        %s624 = scalar_lea.vmem [#allocation9], %s623
        %s625 = sand.u32 %s200, 1
        %s626 = scalar_lea.sflag [#allocation11], %s625
        %s627 = sand.u32 %s200, 1
        %s628 = smul.addr %s627, 8
        %s629 = scalar_lea.vmem [#allocation10], %s628
        // Predicated region
        $region57: #{tpu_custom_call.1} parent=39 // pred_check
          %p630 = pneg %p182
        $region58: #{tpu_custom_call.1} parent=39 // pred_check_branch
          %632 = sbr.rel (%p630) target = $region60
        $region59: #{tpu_custom_call.1} parent=39 // pred_region
          %s634 = ssub.s32 128, 128
          %635 = vsyncadd %s621, %s634
          %s636 = smul.addr %s32, 128
          %s637 = scalar_lea.hbm %s5, %s636
          %s639 = sshll.u32 %s624, 4
          %s640 = int_to_ptr.vmem [resolvable:$true] %s639
          %642 = dma.vmem_to_hbm [thread:$0]  %s640, 128, %s637, %s621
        $region60: #{tpu_custom_call.1} parent=39 // pred_fallthru
          _
        // Predicated region
        $region61: #{tpu_custom_call.1} parent=39 // pred_check
          %p643 = pneg %p210
        $region62: #{tpu_custom_call.1} parent=39 // pred_check_branch
          %645 = sbr.rel (%p643) target = $region64
        $region63: #{tpu_custom_call.1} parent=39 // pred_region
          %s647 = ssub.s32 128, 128
          %648 = vsyncadd %s626, %s647
          %s649 = smul.addr %s32, 2
          %s650 = sadd.s32 %s33, %s649
          %s651 = smul.addr %s650, 128
          %s652 = scalar_lea.hbm %s6, %s651
          %s654 = sshll.u32 %s629, 4
          %s655 = int_to_ptr.vmem [resolvable:$true] %s654
          %657 = dma.vmem_to_hbm [thread:$0]  %s655, 128, %s652, %s626
        $region64: #{tpu_custom_call.1} parent=39 // pred_fallthru
          _
      $region40: #{tpu_custom_call.1} parent=5 // pred_fallthru
        _
      %p658 = scmp.le.s32.totalorder 2, %s23
      // Predicated region
      $region65: #{tpu_custom_call.1} parent=5 // pred_check
        %p659 = pneg %p658
      $region66: #{tpu_custom_call.1} parent=5 // pred_check_branch
        %661 = sbr.rel (%p659) target = $region68
      $region67: #{tpu_custom_call.1} parent=5 // pred_region
        %s662 = ssub.s32 %s23, 2
        // Predicated region
        $region69: #{tpu_custom_call.1} parent=67 // pred_check
          %p663 = pneg %p188
        $region70: #{tpu_custom_call.1} parent=67 // pred_check_branch
          %665 = sbr.rel (%p663) target = $region72
        $region71: #{tpu_custom_call.1} parent=67 // pred_region
          %s666 = sand.u32 %s173, 1
          %s667 = scalar_lea.sflag [#allocation6], %s666
          %s668 = sand.u32 %s173, 1
          %s669 = smul.addr %s668, 8
          %s670 = scalar_lea.vmem [#allocation9], %s669
          %671 = dma.done %s667, 128
        $region72: #{tpu_custom_call.1} parent=67 // pred_fallthru
          _
        // Predicated region
        $region73: #{tpu_custom_call.1} parent=67 // pred_check
          %p672 = pneg %p216
        $region74: #{tpu_custom_call.1} parent=67 // pred_check_branch
          %674 = sbr.rel (%p672) target = $region76
        $region75: #{tpu_custom_call.1} parent=67 // pred_region
          %s675 = sand.u32 %s201, 1
          %s676 = scalar_lea.sflag [#allocation11], %s675
          %s677 = sand.u32 %s201, 1
          %s678 = smul.addr %s677, 8
          %s679 = scalar_lea.vmem [#allocation10], %s678
          %680 = dma.done %s676, 128
        $region76: #{tpu_custom_call.1} parent=67 // pred_fallthru
          _
      $region68: #{tpu_custom_call.1} parent=5 // pred_fallthru
        _
    $region6: #{tpu_custom_call.1} parent=1 // loop_footer
      %s27 = sadd.s32 1, %s23
    $region7: #{tpu_custom_call.1} parent=1 // loop_footer_branch
      %22 = sbr.rel target = $region3
    $region8: #{tpu_custom_call.1} parent=1 // loop_exit
      _
    %681 = vsyncpa [#allocation5], 1
    %s682 = scalar_lea.sflag [#allocation5], 1
    %683 = vsyncpa %s682, 1
    %684 = vsyncpa [#allocation8], 1
    %685 = vsyncpa [#allocation6], 1
    %s686 = scalar_lea.sflag [#allocation6], 1
    %687 = vsyncpa %s686, 1
    %688 = vsyncpa [#allocation11], 1
    %s689 = scalar_lea.sflag [#allocation11], 1
    %690 = vsyncpa %s689, 1

</llo_original>
